<compile_context>
chip_gen: v5e
topology: v5e:2x2
jax: 0.10.0
libtpu: 0.0.40
codegen_flags: <defaults>
</compile_context>

<pallas_src>
import functools

import jax
import jax.numpy as jnp
from jax.experimental import pallas as pl
from jax.experimental.pallas import tpu as pltpu

_LANE = 128


def _round_up(a, b):
    return ((a + b - 1) // b) * b


@functools.lru_cache(maxsize=1)
def _device_kind():
    try:
        return jax.devices()[0].device_kind.lower()
    except Exception:
        return ""


def _num_tensorcores():
    kind = _device_kind()
    # v7x exposes 2 TensorCores per chip; v4/v5p megacore also pair 2 TCs per
    # JAX device.  v2/v3 cores appear as separate devices, so 1 is correct there.
    if "v7" in kind or "7x" in kind or "v4" in kind or "v5p" in kind:
        return 2
    return 1


def _is_v5e():
    kind = _device_kind()
    return "v5 lite" in kind or "v5e" in kind or "v5litepod" in kind


def _make_h_swish_kernel(compute_dtype):
    def kernel(x_ref, o_ref):
        x = x_ref[...].astype(compute_dtype)
        # h_sigmoid = relu6(x + 3) / 6  (divide by 6 for parity with PyTorch).
        hs = jnp.clip(x + 3.0, 0.0, 6.0) / 6.0
        o_ref[...] = (x * hs).astype(o_ref.dtype)   # h_swish = x * h_sigmoid(x)
    return kernel


def h_swish(x, *, tile_rows=8192):
    """Elementwise h_swish over an arbitrary-shape array (e.g. NCHW)."""
    orig_shape = x.shape
    orig_dtype = x.dtype
    n = x.size

    itemsize = jnp.dtype(orig_dtype).itemsize
    pack = max(1, 4 // itemsize)        # sublane packing: 1 f32, 2 bf16, 4 int8
    sub = 8 * pack                      # native packed sublane tile
    tile_rows_eff = tile_rows * pack    # keep blocks ~4 MiB regardless of dtype

    if n % _LANE == 0:
        # Zero-copy fast path: any 128-divisible size reshapes for free.  The
        # (8,128) constraint applies to block_shape, and Pallas masks the
        # partial final block, so rows need not be a multiple of 8.
        rows = n // _LANE
        x2d = x.reshape(rows, _LANE)
        padded = False
    else:
        # TODO(synk): handle the <128-element tail in-kernel (masked store via
        # pltpu.store) to avoid the extra pad/slice HBM passes on ragged sizes.
        n_pad = _round_up(n, _LANE)
        x2d = jnp.pad(jnp.ravel(x), (0, n_pad - n)).reshape(-1, _LANE)
        rows = n_pad // _LANE
        padded = True

    # Biggest block that fits, but on multi-TC chips (v7x) guarantee >= 4
    # parallel grid steps so both TensorCores get >= 2 blocks each and keep
    # their DMA double-buffering.  No forced split on single-TC v5e/v6e.
    num_cores = _num_tensorcores()
    min_steps = 4 if num_cores >= 2 else 1
    tr = min(tile_rows_eff, rows)
    if min_steps > 1 and rows >= min_steps * sub:
        tr = min(tr, _round_up(pl.cdiv(rows, min_steps), sub))
    tr = _round_up(max(tr, sub), sub)

    grid = (pl.cdiv(rows, tr),)  # partial final block is masked by Pallas

    # Native sub-f32 compute on chips with bf16 VALU (v6e/v7x); widen to f32
    # for f32 inputs (trivially), on v5e (no bf16 VALU), and for any non-float.
    if (jnp.issubdtype(orig_dtype, jnp.floating) and itemsize < 4
            and not _is_v5e()):
        compute_dtype = orig_dtype
    else:
        compute_dtype = jnp.float32

    out2d = pl.pallas_call(
        _make_h_swish_kernel(compute_dtype),
        out_shape=jax.ShapeDtypeStruct((rows, _LANE), orig_dtype),
        grid_spec=pltpu.PrefetchScalarGridSpec(
            num_scalar_prefetch=0,
            grid=grid,
            in_specs=[pl.BlockSpec((tr, _LANE), lambda i: (i, 0))],
            out_specs=pl.BlockSpec((tr, _LANE), lambda i: (i, 0)),
        ),
        compiler_params=pltpu.CompilerParams(
            dimension_semantics=("parallel",),
            # ~4 MiB blocks, double-buffered in + out ~= 16 MiB; 32 MiB scoped
            # VMEM leaves headroom and fits v7x's 64 MiB per-TC VMEM.
            vmem_limit_bytes=32 * 1024 * 1024,
        ),
    )(x2d)

    if padded:
        return out2d.reshape(-1)[:n].reshape(orig_shape)
    return out2d.reshape(orig_shape)


def h_swish_ref(x):
    return x * (jnp.clip(x + 3.0, 0.0, 6.0) / 6.0)


if __name__ == "__main__":
    key = jax.random.PRNGKey(0)
    # NCHW input, same convention as the PyTorch module.
    x = jax.random.normal(key, (2, 4, 16, 16), dtype=jnp.float32) * 4.0
    out = jax.block_until_ready(h_swish(x))
    ref = h_swish_ref(x)
    assert out.shape == x.shape and out.dtype == x.dtype
    assert jnp.allclose(out, ref, atol=1e-6, rtol=1e-6), "mismatch vs reference"

    # Larger 128-aligned shape: zero-copy fast path, multiple grid steps on v7x.
    x_big = jax.random.normal(jax.random.PRNGKey(1), (4, 32, 64, 64), jnp.float32)
    out_big = jax.block_until_ready(h_swish(x_big))
    assert jnp.allclose(out_big, h_swish_ref(x_big), atol=1e-6, rtol=1e-6)

    # bf16 input: native bf16 compute on v6e/v7x, f32-widened on v5e.
    x_bf = (jax.random.normal(jax.random.PRNGKey(2), (2, 4, 16, 16),
                              jnp.float32) * 4.0).astype(jnp.bfloat16)
    out_bf = jax.block_until_ready(h_swish(x_bf))
    ref_bf = h_swish_ref(x_bf.astype(jnp.float32))
    assert out_bf.dtype == jnp.bfloat16
    assert jnp.allclose(out_bf.astype(jnp.float32), ref_bf, atol=1e-1, rtol=5e-2)

    # Ragged size (n % 128 != 0): minimal-pad fallback path.
    x_rag = jax.random.normal(jax.random.PRNGKey(3), (3, 5, 7), jnp.float32)
    out_rag = jax.block_until_ready(h_swish(x_rag))
    assert out_rag.shape == x_rag.shape
    assert jnp.allclose(out_rag, h_swish_ref(x_rag), atol=1e-6, rtol=1e-6)

    print("KERNEL_OK")
</pallas_src>

<mosaic_0001>
module attributes {stable_mosaic.version = 11 : i64} {
  func.func @kernel(%arg0: i32, %arg1: memref<16x128xf32, #tpu.memory_space<vmem>>, %arg2: memref<16x128xf32, #tpu.memory_space<vmem>>) attributes {dimension_semantics = [#tpu.dimension_semantics<parallel>], iteration_bounds = array<i64: 1>, scalar_prefetch = 0 : i64, scratch_operands = 0 : i64, tpu.core_type = #tpu.core_type<tc>, window_params = [{transform_indices = @transform_0, window_bounds = array<i64: 16, 128>}, {transform_indices = @transform_1, window_bounds = array<i64: 16, 128>}]} {
    %c0 = arith.constant 0 : index
    %c0_0 = arith.constant 0 : index
    %0 = vector.load %arg1[%c0, %c0_0] : memref<16x128xf32, #tpu.memory_space<vmem>>, vector<16x128xf32>
    %cst = arith.constant 3.000000e+00 : f32
    %1 = vector.broadcast %cst : f32 to vector<16x128xf32>
    %2 = arith.addf %0, %1 : vector<16x128xf32>
    %cst_1 = arith.constant 0.000000e+00 : f32
    %cst_2 = arith.constant 6.000000e+00 : f32
    %3 = vector.broadcast %cst_1 : f32 to vector<16x128xf32>
    %4 = arith.maximumf %3, %2 : vector<16x128xf32>
    %5 = vector.broadcast %cst_2 : f32 to vector<16x128xf32>
    %6 = arith.minimumf %5, %4 : vector<16x128xf32>
    %cst_3 = arith.constant 6.000000e+00 : f32
    %7 = vector.broadcast %cst_3 : f32 to vector<16x128xf32>
    %8 = arith.divf %6, %7 : vector<16x128xf32>
    %9 = arith.mulf %0, %8 : vector<16x128xf32>
    %c0_4 = arith.constant 0 : index
    %c0_5 = arith.constant 0 : index
    %10 = vector.load %arg2[%c0_4, %c0_5] : memref<16x128xf32, #tpu.memory_space<vmem>>, vector<16x128xf32>
    tpu.vector_store %arg2[%c0_4, %c0_5], %9 {strides = array<i32>} : memref<16x128xf32, #tpu.memory_space<vmem>>, vector<16x128xf32>,
    return
  }
  func.func @transform_0(%arg0: i32) -> (i32, i32) {
    %c0_i32 = arith.constant 0 : i32
    %c0_i32_0 = arith.constant 0 : i32
    return %arg0, %c0_i32 : i32, i32
  }
  func.func @transform_1(%arg0: i32) -> (i32, i32) {
    %c0_i32 = arith.constant 0 : i32
    %c0_i32_0 = arith.constant 0 : i32
    return %arg0, %c0_i32 : i32, i32
  }
}

</mosaic_0001>

<llo_original>
// kernel: tpu_custom_call.1
$region0: #{tpu_custom_call.1}
  #allocation0 [shape = 'u32[]', space=smem, size = 0x4, offset = 0x4, fixed_abs, tag = 'smem constant byte address 0x4 - core index']
  #allocation1 [shape = 'u32[72,128]{1,0:T(1,128)}', space=vmem, size = 0x9000, scoped, tag = 'internal scratch']
  %s0 = inlined_call_operand.hbm [shape: f32[16,128], index: 0, kind: input, shape index: {}]
  %s1 = inlined_call_operand.hbm [shape: f32[16,128], index: 1, kind: output, shape index: {}]
  %s2 = sld [smem:[#allocation0]]
  $region18: #{tpu_custom_call.1} parent=0
    _
  %s4 = ssub.s32 1, %s2
  %s5 = scalar_select 0, %s4, %s2
  $region1: #{tpu_custom_call.1} parent=0
    #allocation2 [shape = 'u8[8192]{0}', space=vmem, size = 0x2000, scoped, tag = 'input window, operand 0, single buffered']
    #allocation3 [shape = 's32[1]{0}', space=sflag, size = 0x4, scoped, tag = 'scoped memory for tpu_custom_call.1']
    #allocation4 [shape = 's32[1]{0}', space=sflag, size = 0x4, scoped, tag = 'scoped memory for tpu_custom_call.1']
    #allocation5 [shape = 'u8[8192]{0}', space=vmem, size = 0x2000, scoped, tag = 'output window, operand 0, single buffered']
    %6 = vsyncpa [#allocation3], 0
    %7 = vsyncpa [#allocation4], 0
    // Predicated region
    $region2: #{tpu_custom_call.1} parent=1 // pred_check
      _
    $region3: #{tpu_custom_call.1} parent=1 // pred_check_branch
      %9 = sbr.rel (0) target = $region5
    $region4: #{tpu_custom_call.1} parent=1 // pred_region
      %11 = vsyncadd [#allocation3], 0
      %s12 = sshll.u32 %s0, 4
      %s13 = int_to_ptr.hbm [resolvable:$true] %s12
      %s14 = sshll.u32 [#allocation2], 4
      %s15 = int_to_ptr.vmem [resolvable:$true] %s14
      %20 = dma.hbm_to_vmem [thread:$0]  %s13, 256, %s15, [#allocation3], 128, 128, 8
    $region5: #{tpu_custom_call.1} parent=1 // pred_fallthru
      _
    // Predicated region
    $region6: #{tpu_custom_call.1} parent=1 // pred_check
      _
    $region7: #{tpu_custom_call.1} parent=1 // pred_check_branch
      %22 = sbr.rel (0) target = $region9
    $region8: #{tpu_custom_call.1} parent=1 // pred_region
      %24 = dma.done [#allocation3], 256
    $region9: #{tpu_custom_call.1} parent=1 // pred_fallthru
      _
    %v25 = vld [vmem:[#allocation2] sm:$0xff]
    %v26 = vld [vmem:[#allocation2 + $0x8] sm:$0xff]
    %v27 = vadd.f32 %v25, 3.0
    %v28 = vadd.f32 %v26, 3.0
    %v29 = vmax.f32 %v27, 0.0
    %v30 = vmax.f32 %v28, 0.0
    %v31 = vmin.f32 %v29, 6.0
    %v32 = vmin.f32 %v30, 6.0
    %v33 = vrcp.pop 6.0
    %v34 = vmul.f32 6.0, %v33
    %v35 = vsub.f32 1.0, %v34
    %v36 = vmul.f32 %v33, %v35
    %v37 = vadd.f32 %v33, %v36
    %vm38 = vweird.f32 %v33
    %v39 = vsel %vm38, %v33, %v37
    %v40 = vmul.f32 %v31, %v39
    %v41 = vmul.f32 %v32, %v39
    %v42 = vmul.f32 %v25, %v40
    %v43 = vmul.f32 %v26, %v41
    %44 = vst [vmem:[#allocation5] sm:$0xff] %v42
    %45 = vst [vmem:[#allocation5 + $0x8] sm:$0xff] %v43
    // Predicated region
    $region10: #{tpu_custom_call.1} parent=1 // pred_check
      _
    $region11: #{tpu_custom_call.1} parent=1 // pred_check_branch
      %47 = sbr.rel (0) target = $region13
    $region12: #{tpu_custom_call.1} parent=1 // pred_region
      %49 = vsyncadd [#allocation4], 0
      %s50 = sshll.u32 [#allocation5], 4
      %s51 = int_to_ptr.vmem [resolvable:$true] %s50
      %s52 = sshll.u32 %s1, 4
      %s53 = int_to_ptr.hbm [resolvable:$true] %s52
      %58 = dma.vmem_to_hbm [thread:$0]  %s51, 256, %s53, [#allocation4], 128, 128, 8
    $region13: #{tpu_custom_call.1} parent=1 // pred_fallthru
      _
    // Predicated region
    $region14: #{tpu_custom_call.1} parent=1 // pred_check
      _
    $region15: #{tpu_custom_call.1} parent=1 // pred_check_branch
      %60 = sbr.rel (0) target = $region17
    $region16: #{tpu_custom_call.1} parent=1 // pred_region
      %62 = dma.done [#allocation4], 256
    $region17: #{tpu_custom_call.1} parent=1 // pred_fallthru
      _
    %63 = vsyncpa [#allocation3], 1
    %64 = vsyncpa [#allocation4], 1

</llo_original>
